<compile_context>
chip_gen: v7x
topology: tpu7x:2x2x1
jax: 0.10.0
libtpu: 0.0.40
codegen_flags: <defaults>
</compile_context>

<pallas_src>
import jax
import jax.numpy as jnp
from jax.experimental import pallas as pl
from jax.experimental.pallas import tpu as pltpu


_LANE = 128       # lane width: last block dim must be a multiple of this
_SUBLANE = 8      # sublane width: second-to-last block dim multiple of this
_NEG_BIG = -1e30  # bias for padded vocab columns (exp() underflows to zero)


def _round_up(a, b):
    return (a + b - 1) // b * b


def _vmem_capacity_bytes():
    """Physical per-core VMEM (generation aware), with a conservative fallback."""
    try:
        return int(pltpu.get_tpu_info().vmem_capacity_bytes)
    except Exception:
        return 64 << 20  # assume v7x (smallest) if the query is unavailable


def _vmem_estimate(tm, tn, d, x_bytes, w_bytes, out_bytes):
    """Per-step VMEM footprint for the pipelined blocks + temporaries."""
    return (2 * tm * d * x_bytes          # x row tile (double buffered)
            + 2 * d * tn * w_bytes        # weight tile (double buffered)
            + 2 * tn * 4                  # bias tile
            + 2 * tm * tn * out_bytes     # output tile (double buffered)
            + 2 * tm * 4                  # running max / sum scratch
            + 3 * tm * tn * 4)            # f32 logits / exp temporaries


def _choose_tiles(d, v_lane, x_bytes, w_bytes, out_bytes, budget):
    """Pick (tm, tn): prefer MXU-sized tiles (tm=256, tn multiple of 256)."""
    tn_cands = sorted({min(v_lane, c) for c in (2048, 1024, 512, 256, 128)},
                      reverse=True)
    for tm in (256, 128, 64, 32, 16, 8):
        for tn in tn_cands:
            if _vmem_estimate(tm, tn, d, x_bytes, w_bytes, out_bytes) <= budget:
                return tm, tn
    return 8, 128  # last resort; vmem_limit below will surface any overflow


def _block_spec(shape, index_map, *, buffers=None):
    """BlockSpec; constant-index blocks can be single-buffered (no prefetch)."""
    if buffers is not None:
        try:
            return pl.BlockSpec(shape, index_map,
                                pipeline_mode=pl.Buffered(buffers))
        except TypeError:  # older jax without pipeline_mode support
            pass
    return pl.BlockSpec(shape, index_map)


def _generator_kernel(x_ref, w_ref, b_ref, o_ref, m_ref, l_ref):
    """One (row-tile, phase, vocab-tile) grid step.

    phase 0: accumulate online logsumexp stats (running max m, running sum l).
    phase 1: recompute the logits tile and emit log-probs.
    """
    p = pl.program_id(1)   # phase
    j = pl.program_id(2)   # vocab tile

    # Projection tile on the MXU: bf16 x bf16 -> f32 accumulation.
    logits = jnp.dot(x_ref[...], w_ref[...],
                     preferred_element_type=jnp.float32) + b_ref[...]

    @pl.when(jnp.logical_and(p == 0, j == 0))
    def _init():
        m_ref[...] = jnp.full_like(m_ref, -jnp.inf)
        l_ref[...] = jnp.zeros_like(l_ref)

    @pl.when(p == 0)
    def _stats():
        m_prev = m_ref[...]
        m_new = jnp.maximum(m_prev, jnp.max(logits, axis=-1, keepdims=True))
        l_ref[...] = (l_ref[...] * jnp.exp(m_prev - m_new)
                      + jnp.sum(jnp.exp(logits - m_new), axis=-1, keepdims=True))
        m_ref[...] = m_new

    @pl.when(p == 1)
    def _emit():
        lse = m_ref[...] + jnp.log(l_ref[...])
        o_ref[...] = (logits - lse).astype(o_ref.dtype)


def generator_forward(x, w, b, *, out_dtype=None):
    """log_softmax(x @ w + b, axis=-1).

    x: [B, S, D] activations (bf16 preferred upstream; cast once here if not).
    w: [D, V]    projection weight (torch nn.Linear weight transposed); pass it
                 persistently stored in bf16 to avoid a per-call cast.
    b: [V]       bias.
    """
    B, S, D = x.shape
    Dw, V = w.shape
    assert Dw == D and b.shape == (V,)
    out_dtype = x.dtype if out_dtype is None else jnp.dtype(out_dtype)

    r = B * S
    v_lane = _round_up(V, _LANE)                     # lane-dense output stores

    x_bytes, w_bytes = 2, 2                          # bf16 in-kernel operands
    out_bytes = jnp.dtype(out_dtype).itemsize

    capacity = _vmem_capacity_bytes()
    budget = min(int(0.80 * capacity), 110 << 20)    # ~51 MiB v7x, ~102 MiB v5e/v6e
    tm, tn = _choose_tiles(D, v_lane, x_bytes, w_bytes, out_bytes, budget)

    # Small problems: shrink the row tile so the grid still has >= 2 row steps
    # (DMA/compute overlap + v7x dual-TensorCore sharding) without huge padding.
    if r < 2 * tm:
        tm = max(_SUBLANE, _round_up(int(pl.cdiv(r, 2)), _SUBLANE))
    grid_rows = max(2, int(pl.cdiv(r, tm)))
    grid_rows += grid_rows % 2                       # even => clean 2-TC split (v7x)
    r_pad = grid_rows * tm

    v_pad = _round_up(v_lane, tn)
    n_vtiles = v_pad // tn

    # --- Host-side layout prep: each cast / pad happens exactly once. ---
    x2 = x.reshape(r, D).astype(jnp.bfloat16)
    if r_pad != r:
        x2 = jnp.pad(x2, ((0, r_pad - r), (0, 0)))
    w2 = w.astype(jnp.bfloat16)
    b2 = b.astype(jnp.float32).reshape(1, V)
    if v_pad != V:
        w2 = jnp.pad(w2, ((0, 0), (0, v_pad - V)))
        b2 = jnp.pad(b2, ((0, 0), (0, v_pad - V)), constant_values=_NEG_BIG)

    est = _vmem_estimate(tm, tn, D, x_bytes, w_bytes, out_bytes)
    vmem_limit = int(max(4 << 20, min(budget, est * 1.25 + (1 << 20))))

    # Constant-index blocks (whole vocab in one tile) need no double buffer.
    const_buf = 1 if n_vtiles == 1 else None
    w_spec = _block_spec((D, tn), lambda i, p, j: (0, j), buffers=const_buf)
    b_spec = _block_spec((1, tn), lambda i, p, j: (0, j), buffers=const_buf)

    out = pl.pallas_call(
        _generator_kernel,
        out_shape=jax.ShapeDtypeStruct((r_pad, v_pad), out_dtype),
        grid_spec=pltpu.PrefetchScalarGridSpec(
            num_scalar_prefetch=0,
            grid=(grid_rows, 2, n_vtiles),           # rows | phase | vocab tiles
            in_specs=[
                pl.BlockSpec((tm, D), lambda i, p, j: (i, 0)),  # x, resident over p/j
                w_spec,
                b_spec,
            ],
            # Phase 0 parks the output window on vocab block 0 (no writeback
            # churn); phase 1 walks the vocab blocks and writes log-probs.
            out_specs=pl.BlockSpec((tm, tn), lambda i, p, j: (i, p * j)),
            scratch_shapes=[
                pltpu.VMEM((tm, 1), jnp.float32),    # running max
                pltpu.VMEM((tm, 1), jnp.float32),    # running sum of exp
            ],
        ),
        compiler_params=pltpu.CompilerParams(
            dimension_semantics=("parallel", "arbitrary", "arbitrary"),
            vmem_limit_bytes=vmem_limit),
    )(x2, w2, b2)

    return out[:r, :V].reshape(B, S, V)


def _reference(x, w, b):
    # Mirrors the kernel numerics: bf16 operands, f32 accumulation + softmax.
    B, S, D = x.shape
    xf = x.astype(jnp.bfloat16).astype(jnp.float32).reshape(B * S, D)
    wf = w.astype(jnp.bfloat16).astype(jnp.float32)
    logits = xf @ wf + b.astype(jnp.float32)[None, :]
    out = jax.nn.log_softmax(logits, axis=-1)
    return out.astype(x.dtype).reshape(B, S, -1)


if __name__ == "__main__":
    key = jax.random.PRNGKey(0)
    B, S, D, V = 2, 8, 32, 128          # batch, seq, d_model, vocab

    kx, kw, kb = jax.random.split(key, 3)
    x = jax.random.normal(kx, (B, S, D), dtype=jnp.float32)
    # nn.Linear(d_model, vocab) weight is [V, D] in torch; stored transposed
    # here as [D, V] and kept persistently in bf16 (cast once, not per call).
    w = (jax.random.normal(kw, (D, V), dtype=jnp.float32) * 0.05).astype(jnp.bfloat16)
    b = jax.random.normal(kb, (V,), dtype=jnp.float32) * 0.05

    out = generator_forward(x, w, b)
    out = jax.block_until_ready(out)

    ref = _reference(x, w, b)
    assert out.shape == (B, S, V)
    assert out.dtype == x.dtype
    assert jnp.allclose(out, ref, atol=1e-4, rtol=1e-4), \
        float(jnp.max(jnp.abs(out - ref)))
    # Each row of exp(log_softmax) must sum to 1.
    assert jnp.allclose(jnp.sum(jnp.exp(out), axis=-1), 1.0, atol=1e-3)

    print("KERNEL_OK")
</pallas_src>

<mosaic_0001>
module attributes {stable_mosaic.version = 11 : i64} {
  func.func @_generator_kernel(%arg0: i32, %arg1: i32, %arg2: i32, %arg3: memref<8x32xbf16, #tpu.memory_space<vmem>>, %arg4: memref<32x128xbf16, #tpu.memory_space<vmem>>, %arg5: memref<1x128xf32, #tpu.memory_space<vmem>>, %arg6: memref<8x128xf32, #tpu.memory_space<vmem>>, %arg7: memref<8x1xf32, #tpu.memory_space<vmem>>, %arg8: memref<8x1xf32, #tpu.memory_space<vmem>>) attributes {dimension_semantics = [#tpu.dimension_semantics<parallel>, #tpu.dimension_semantics<arbitrary>, #tpu.dimension_semantics<arbitrary>], iteration_bounds = array<i64: 2, 2, 1>, scalar_prefetch = 0 : i64, scratch_operands = 2 : i64, tpu.core_type = #tpu.core_type<tc>, window_params = [{transform_indices = @transform_0, window_bounds = array<i64: 8, 32>}, {pipeline_mode = #tpu.pipeline_mode<synchronous>, transform_indices = @transform_1, window_bounds = array<i64: 32, 128>}, {pipeline_mode = #tpu.pipeline_mode<synchronous>, transform_indices = @transform_2, window_bounds = array<i64: 1, 128>}, {transform_indices = @transform_3, window_bounds = array<i64: 8, 128>}]} {
    %c0 = arith.constant 0 : index
    %c0_0 = arith.constant 0 : index
    %0 = vector.load %arg3[%c0, %c0_0] : memref<8x32xbf16, #tpu.memory_space<vmem>>, vector<8x32xbf16>
    %c0_1 = arith.constant 0 : index
    %c0_2 = arith.constant 0 : index
    %1 = vector.load %arg4[%c0_1, %c0_2] : memref<32x128xbf16, #tpu.memory_space<vmem>>, vector<32x128xbf16>
    %cst = arith.constant dense<0.000000e+00> : vector<8x128xf32>
    %2 = tpu.matmul %0, %1, %cst {dimension_numbers = #tpu.dot_dimension_numbers<[1], [0], [0], [1], [0, 0, 1, 1], [], []>} : vector<8x32xbf16>, vector<32x128xbf16>, vector<8x128xf32> -> vector<8x128xf32>
    %c0_3 = arith.constant 0 : index
    %c0_4 = arith.constant 0 : index
    %3 = vector.load %arg5[%c0_3, %c0_4] : memref<1x128xf32, #tpu.memory_space<vmem>>, vector<1x128xf32>
    %4 = vector.broadcast %3 : vector<1x128xf32> to vector<8x128xf32>
    %5 = arith.addf %2, %4 : vector<8x128xf32>
    %c0_i32 = arith.constant 0 : i32
    %6 = arith.cmpi eq, %arg1, %c0_i32 : i32
    %c0_i32_5 = arith.constant 0 : i32
    %7 = arith.cmpi eq, %arg2, %c0_i32_5 : i32
    %8 = arith.andi %6, %7 : i1
    %9 = arith.extui %8 : i1 to i32
    %c0_i32_6 = arith.constant 0 : i32
    %10 = arith.cmpi ne, %9, %c0_i32_6 : i32
    scf.if %10 {
      %cst_10 = arith.constant 0xFF800000 : f32
      %17 = vector.broadcast %cst_10 : f32 to vector<8x1xf32>
      %c0_11 = arith.constant 0 : index
      %c0_12 = arith.constant 0 : index
      %18 = vector.load %arg7[%c0_11, %c0_12] : memref<8x1xf32, #tpu.memory_space<vmem>>, vector<8x1xf32>
      tpu.vector_store %arg7[%c0_11, %c0_12], %17 {strides = array<i32>} : memref<8x1xf32, #tpu.memory_space<vmem>>, vector<8x1xf32>,
      %cst_13 = arith.constant 0.000000e+00 : f32
      %19 = vector.broadcast %cst_13 : f32 to vector<8x1xf32>
      %c0_14 = arith.constant 0 : index
      %c0_15 = arith.constant 0 : index
      %20 = vector.load %arg8[%c0_14, %c0_15] : memref<8x1xf32, #tpu.memory_space<vmem>>, vector<8x1xf32>
      tpu.vector_store %arg8[%c0_14, %c0_15], %19 {strides = array<i32>} : memref<8x1xf32, #tpu.memory_space<vmem>>, vector<8x1xf32>,
    } else {
    }
    %c0_i32_7 = arith.constant 0 : i32
    %11 = arith.cmpi eq, %arg1, %c0_i32_7 : i32
    %12 = arith.extui %11 : i1 to i32
    %c0_i32_8 = arith.constant 0 : i32
    %13 = arith.cmpi ne, %12, %c0_i32_8 : i32
    scf.if %13 {
      %c0_10 = arith.constant 0 : index
      %c0_11 = arith.constant 0 : index
      %17 = vector.load %arg7[%c0_10, %c0_11] : memref<8x1xf32, #tpu.memory_space<vmem>>, vector<8x1xf32>
      %cst_12 = arith.constant dense<0xFF800000> : vector<8xf32>
      %18 = vector.multi_reduction <maximumf>, %5, %cst_12 [1] : vector<8x128xf32> to vector<8xf32>
      %19 = vector.shape_cast %18 : vector<8xf32> to vector<8x1xf32>
      %20 = arith.maximumf %17, %19 : vector<8x1xf32>
      %c0_13 = arith.constant 0 : index
      %c0_14 = arith.constant 0 : index
      %21 = vector.load %arg8[%c0_13, %c0_14] : memref<8x1xf32, #tpu.memory_space<vmem>>, vector<8x1xf32>
      %22 = arith.subf %17, %20 : vector<8x1xf32>
      %23 = math.exp %22 : vector<8x1xf32>
      %24 = arith.mulf %21, %23 : vector<8x1xf32>
      %25 = vector.broadcast %20 : vector<8x1xf32> to vector<8x128xf32>
      %26 = arith.subf %5, %25 : vector<8x128xf32>
      %27 = math.exp %26 : vector<8x128xf32>
      %cst_15 = arith.constant dense<0.000000e+00> : vector<8xf32>
      %28 = vector.multi_reduction <add>, %27, %cst_15 [1] : vector<8x128xf32> to vector<8xf32>
      %29 = vector.shape_cast %28 : vector<8xf32> to vector<8x1xf32>
      %30 = arith.addf %24, %29 : vector<8x1xf32>
      %c0_16 = arith.constant 0 : index
      %c0_17 = arith.constant 0 : index
      %31 = vector.load %arg8[%c0_16, %c0_17] : memref<8x1xf32, #tpu.memory_space<vmem>>, vector<8x1xf32>
      tpu.vector_store %arg8[%c0_16, %c0_17], %30 {strides = array<i32>} : memref<8x1xf32, #tpu.memory_space<vmem>>, vector<8x1xf32>,
      %c0_18 = arith.constant 0 : index
      %c0_19 = arith.constant 0 : index
      %32 = vector.load %arg7[%c0_18, %c0_19] : memref<8x1xf32, #tpu.memory_space<vmem>>, vector<8x1xf32>
      tpu.vector_store %arg7[%c0_18, %c0_19], %20 {strides = array<i32>} : memref<8x1xf32, #tpu.memory_space<vmem>>, vector<8x1xf32>,
    } else {
    }
    %c1_i32 = arith.constant 1 : i32
    %14 = arith.cmpi eq, %arg1, %c1_i32 : i32
    %15 = arith.extui %14 : i1 to i32
    %c0_i32_9 = arith.constant 0 : i32
    %16 = arith.cmpi ne, %15, %c0_i32_9 : i32
    scf.if %16 {
      %c0_10 = arith.constant 0 : index
      %c0_11 = arith.constant 0 : index
      %17 = vector.load %arg7[%c0_10, %c0_11] : memref<8x1xf32, #tpu.memory_space<vmem>>, vector<8x1xf32>
      %c0_12 = arith.constant 0 : index
      %c0_13 = arith.constant 0 : index
      %18 = vector.load %arg8[%c0_12, %c0_13] : memref<8x1xf32, #tpu.memory_space<vmem>>, vector<8x1xf32>
      %19 = math.log %18 : vector<8x1xf32>
      %20 = arith.addf %17, %19 : vector<8x1xf32>
      %21 = vector.broadcast %20 : vector<8x1xf32> to vector<8x128xf32>
      %22 = arith.subf %5, %21 : vector<8x128xf32>
      %c0_14 = arith.constant 0 : index
      %c0_15 = arith.constant 0 : index
      %23 = vector.load %arg6[%c0_14, %c0_15] : memref<8x128xf32, #tpu.memory_space<vmem>>, vector<8x128xf32>
      tpu.vector_store %arg6[%c0_14, %c0_15], %22 {strides = array<i32>} : memref<8x128xf32, #tpu.memory_space<vmem>>, vector<8x128xf32>,
    } else {
    }
    return
  }
  func.func @transform_0(%arg0: i32, %arg1: i32, %arg2: i32) -> (i32, i32) {
    %c0_i32 = arith.constant 0 : i32
    %c0_i32_0 = arith.constant 0 : i32
    return %arg0, %c0_i32 : i32, i32
  }
  func.func @transform_1(%arg0: i32, %arg1: i32, %arg2: i32) -> (i32, i32) {
    %c0_i32 = arith.constant 0 : i32
    %c0_i32_0 = arith.constant 0 : i32
    return %c0_i32, %arg2 : i32, i32
  }
  func.func @transform_2(%arg0: i32, %arg1: i32, %arg2: i32) -> (i32, i32) {
    %c0_i32 = arith.constant 0 : i32
    %c0_i32_0 = arith.constant 0 : i32
    return %c0_i32, %arg2 : i32, i32
  }
  func.func @transform_3(%arg0: i32, %arg1: i32, %arg2: i32) -> (i32, i32) {
    %0 = arith.muli %arg1, %arg2 : i32
    %c0_i32 = arith.constant 0 : i32
    return %arg0, %0 : i32, i32
  }
}

</mosaic_0001>

<llo_original>
// kernel: tpu_custom_call.1
$region0: #{tpu_custom_call.1}
  #allocation0 [shape = 'u32[]', space=smem, size = 0x4, offset = 0x4, fixed_abs, tag = 'smem constant byte address 0x4 - core index']
  #allocation1 [shape = 'u32[144,128]{1,0:T(1,128)}', space=vmem, size = 0x12000, scoped, tag = 'internal scratch']
  #allocation2 [shape = 'f32[8,1]{1,0:T(8,128)}', space=vmem, size = 0x1000, scoped, tag = 'scratch operand']
  #allocation3 [shape = 'f32[8,1]{1,0:T(8,128)}', space=vmem, size = 0x1000, scoped, tag = 'scratch operand']
  %s0 = inlined_call_operand.hbm [shape: bf16[16,32], index: 0, kind: input, shape index: {}]
  %s1 = inlined_call_operand.hbm [shape: bf16[32,128], index: 1, kind: input, shape index: {}]
  %s2 = inlined_call_operand.vmem [shape: f32[1,128], index: 2, kind: input, shape index: {}]
  %s3 = inlined_call_operand.hbm [shape: f32[16,128], index: 3, kind: output, shape index: {}]
  %s4 = sld [smem:[#allocation0]]
  $region65: #{tpu_custom_call.1} parent=0
    _
  %s6 = ssub.s32 1, %s4
  %s7 = scalar_select 0, %s6, %s4
  $region1: #{tpu_custom_call.1} parent=0
    #allocation4 [shape = 'u8[4096]{0}', space=vmem, size = 0x1000, scoped, tag = 'input window, operand 0']
    #allocation5 [shape = 's32[2]{0}', space=sflag, size = 0x8, scoped, tag = 'scoped memory for tpu_custom_call.1']
    #allocation6 [shape = 's32[2]{0}', space=sflag, size = 0x8, scoped, tag = 'scoped memory for tpu_custom_call.1']
    #allocation7 [shape = 'u8[8192]{0}', space=vmem, size = 0x2000, scoped, tag = 'input window, operand 1, single buffered']
    #allocation8 [shape = 's32[1]{0}', space=sflag, size = 0x4, scoped, tag = 'scoped memory for tpu_custom_call.1']
    #allocation9 [shape = 'u8[8192]{0}', space=vmem, size = 0x2000, scoped, tag = 'output window, operand 0']
    %8 = vsyncpa [#allocation5], 0
    %s9 = scalar_lea.sflag [#allocation5], 1
    %10 = vsyncpa %s9, 0
    %11 = vsyncpa [#allocation8], 0
    %12 = vsyncpa [#allocation6], 0
    %s13 = scalar_lea.sflag [#allocation6], 1
    %14 = vsyncpa %s13, 0
    loop: start=0, step=1, limit=6
    $region2: #{tpu_custom_call.1} parent=1 // loop_pre_header
      _
    $region3: #{tpu_custom_call.1} parent=1 // loop_header
      %s16 = sphi 0, %s20
      %p17 = scmp.ge.s32.totalorder %s16, 6
      %s23 = sphi 0, %s42
      %s24 = sphi 0, %s38
      %s25 = sphi 0, %s34
      %s26 = sphi 0, %s23
      %s27 = sphi 0, %s24
      %s28 = sphi 0, %s25
      %s29 = sphi 0, %s26
      %s30 = sphi 0, %s27
      %s31 = sphi 0, %s28
      %s45 = sphi 0, %s47
      %s48 = sphi 0, %s45
      %s49 = sphi 0, %s48
      %s65 = sphi 0, %s49
      %s71 = sphi 0, %s73
      %s74 = sphi 0, %s71
      %s75 = sphi 0, %s74
      %s91 = sphi 0, %s75
      %s97 = sphi 0, %s99
      %s100 = sphi 0, %s97
      %s101 = sphi 0, %s100
      %s117 = sphi 0, %s101
      %s127 = sphi 0, %s129
      %s130 = sphi 0, %s127
      %s131 = sphi 0, %s130
      %s147 = sphi 0, %s131
    $region4: #{tpu_custom_call.1} parent=1 // loop_header_branch
      %19 = sbr.rel (%p17) target = $region8
    $region5: #{tpu_custom_call.1} parent=1 // loop_body
      %s21 = ssub.s32 %s16, 1
      %s22 = ssub.s32 %s16, 2
      %s32 = sadd.s32 1, %s25
      %p33 = scmp.ge.s32.totalorder %s32, 1
      %s34 = scalar_select %p33, 0, %s32
      %s35 = sadd.s32 1, %s24
      %s36 = scalar_select %p33, %s35, %s24
      %p37 = scmp.ge.s32.totalorder %s36, 2
      %s38 = scalar_select %p37, 0, %s36
      %s39 = sadd.s32 1, %s23
      %s40 = scalar_select %p37, %s39, %s23
      %p41 = scmp.ge.s32.totalorder %s40, 2
      %s42 = scalar_select %p41, 0, %s40
      %s43 = ssub.s32 %s23, %s42
      %p44 = scmp.eq.s32.totalorder %s43, 0
      %s46 = sadd.s32 %s45, 1
      %s47 = scalar_select %p44, %s45, %s46
      %p50 = pneg %p44
      %p51 = scmp.eq.s32.totalorder %s16, 3
      %p52 = por %p50, %p51
      %p53 = scmp.ne.s32.totalorder %s45, %s48
      %p54 = scmp.eq.s32.totalorder %s16, 0
      %p55 = por %p53, %p54
      %p56 = scmp.ne.s32.totalorder %s45, %s48
      %p57 = scmp.eq.s32.totalorder %s21, 3
      %p58 = por %p56, %p57
      %p59 = scmp.ne.s32.totalorder %s48, %s49
      %p60 = scmp.eq.s32.totalorder %s21, 0
      %p61 = por %p59, %p60
      %p62 = scmp.ne.s32.totalorder %s48, %s49
      %p63 = scmp.eq.s32.totalorder %s22, 3
      %p64 = por %p62, %p63
      %p66 = scmp.ne.s32.totalorder %s49, %s65
      %p67 = scmp.eq.s32.totalorder %s22, 0
      %p68 = por %p66, %p67
      %s69 = ssub.s32 %s25, %s34
      %p70 = scmp.eq.s32.totalorder %s69, 0
      %s72 = sadd.s32 %s71, 1
      %s73 = scalar_select %p70, %s71, %s72
      %p76 = pneg %p70
      %p77 = scmp.eq.s32.totalorder %s16, 3
      %p78 = por %p76, %p77
      %p79 = scmp.ne.s32.totalorder %s71, %s74
      %p80 = scmp.eq.s32.totalorder %s16, 0
      %p81 = por %p79, %p80
      %p82 = scmp.ne.s32.totalorder %s71, %s74
      %p83 = scmp.eq.s32.totalorder %s21, 3
      %p84 = por %p82, %p83
      %p85 = scmp.ne.s32.totalorder %s74, %s75
      %p86 = scmp.eq.s32.totalorder %s21, 0
      %p87 = por %p85, %p86
      %p88 = scmp.ne.s32.totalorder %s74, %s75
      %p89 = scmp.eq.s32.totalorder %s22, 3
      %p90 = por %p88, %p89
      %p92 = scmp.ne.s32.totalorder %s75, %s91
      %p93 = scmp.eq.s32.totalorder %s22, 0
      %p94 = por %p92, %p93
      %s95 = ssub.s32 %s25, %s34
      %p96 = scmp.eq.s32.totalorder %s95, 0
      %s98 = sadd.s32 %s97, 1
      %s99 = scalar_select %p96, %s97, %s98
      %p102 = pneg %p96
      %p103 = scmp.eq.s32.totalorder %s16, 3
      %p104 = por %p102, %p103
      %p105 = scmp.ne.s32.totalorder %s97, %s100
      %p106 = scmp.eq.s32.totalorder %s16, 0
      %p107 = por %p105, %p106
      %p108 = scmp.ne.s32.totalorder %s97, %s100
      %p109 = scmp.eq.s32.totalorder %s21, 3
      %p110 = por %p108, %p109
      %p111 = scmp.ne.s32.totalorder %s100, %s101
      %p112 = scmp.eq.s32.totalorder %s21, 0
      %p113 = por %p111, %p112
      %p114 = scmp.ne.s32.totalorder %s100, %s101
      %p115 = scmp.eq.s32.totalorder %s22, 3
      %p116 = por %p114, %p115
      %p118 = scmp.ne.s32.totalorder %s101, %s117
      %p119 = scmp.eq.s32.totalorder %s22, 0
      %p120 = por %p118, %p119
      %s121 = smul.u32 %s24, %s25
      %s122 = smul.u32 %s38, %s34
      %s123 = ssub.s32 %s23, %s42
      %s124 = ssub.s32 %s121, %s122
      %s125 = sor.u32 %s123, %s124
      %p126 = scmp.eq.s32.totalorder %s125, 0
      %s128 = sadd.s32 %s127, 1
      %s129 = scalar_select %p126, %s127, %s128
      %p132 = pneg %p126
      %p133 = scmp.eq.s32.totalorder %s16, 3
      %p134 = por %p132, %p133
      %p135 = scmp.ne.s32.totalorder %s127, %s130
      %p136 = scmp.eq.s32.totalorder %s16, 0
      %p137 = por %p135, %p136
      %p138 = scmp.ne.s32.totalorder %s127, %s130
      %p139 = scmp.eq.s32.totalorder %s21, 3
      %p140 = por %p138, %p139
      %p141 = scmp.ne.s32.totalorder %s130, %s131
      %p142 = scmp.eq.s32.totalorder %s21, 0
      %p143 = por %p141, %p142
      %p144 = scmp.ne.s32.totalorder %s130, %s131
      %p145 = scmp.eq.s32.totalorder %s22, 3
      %p146 = por %p144, %p145
      %p148 = scmp.ne.s32.totalorder %s131, %s147
      %p149 = scmp.eq.s32.totalorder %s22, 0
      %p150 = por %p148, %p149
      %p151 = scmp.le.s32.totalorder 1, %s16
      %p152 = scmp.lt.s32.totalorder %s16, 5
      %p153 = pnand %p151, %p152
      %p154 = pneg %p153
      // Predicated region
      $region9: #{tpu_custom_call.1} parent=5 // pred_check
        _
      $region10: #{tpu_custom_call.1} parent=5 // pred_check_branch
        %156 = sbr.rel (%p153) target = $region12
      $region11: #{tpu_custom_call.1} parent=5 // pred_region
        %s157 = ssub.s32 %s16, 1
        // Predicated region
        $region13: #{tpu_custom_call.1} parent=11 // pred_check
          %p158 = pneg %p87
        $region14: #{tpu_custom_call.1} parent=11 // pred_check_branch
          %160 = sbr.rel (%p158) target = $region16
        $region15: #{tpu_custom_call.1} parent=11 // pred_region
          %s162 = ssub.s32 256, 256
          %163 = vsyncadd [#allocation8], %s162
          %s164 = smul.addr %s28, 64
          %s165 = scalar_lea.hbm %s1, %s164
          %s166 = sshll.u32 [#allocation7], 4
          %s167 = int_to_ptr.vmem [resolvable:$true] %s166
          %172 = dma.hbm_to_vmem [thread:$0]  %s165, 256, %s167, [#allocation8], 64, 64, 4
        $region16: #{tpu_custom_call.1} parent=11 // pred_fallthru
          _
        // Predicated region
        $region17: #{tpu_custom_call.1} parent=11 // pred_check
          %p173 = pneg %p113
        $region18: #{tpu_custom_call.1} parent=11 // pred_check_branch
          %175 = sbr.rel (%p173) target = $region20
        $region19: #{tpu_custom_call.1} parent=11 // pred_region
          %p176 = scmp.lt.s32.totalorder %s28, 0
          %s177 = scalar_select %p176, %s28, 0
          %s178 = scalar_lea.vmem %s2, %s177
        $region20: #{tpu_custom_call.1} parent=11 // pred_fallthru
          _
      $region12: #{tpu_custom_call.1} parent=5 // pred_fallthru
        _
      %p179 = scmp.lt.s32.totalorder %s16, 4
      // Predicated region
      $region21: #{tpu_custom_call.1} parent=5 // pred_check
        %p180 = pneg %p179
      $region22: #{tpu_custom_call.1} parent=5 // pred_check_branch
        %182 = sbr.rel (%p180) target = $region24
      $region23: #{tpu_custom_call.1} parent=5 // pred_region
        // Predicated region
        $region25: #{tpu_custom_call.1} parent=23 // pred_check
          %p183 = pneg %p55
        $region26: #{tpu_custom_call.1} parent=23 // pred_check_branch
          %185 = sbr.rel (%p183) target = $region28
        $region27: #{tpu_custom_call.1} parent=23 // pred_region
          %s186 = sand.u32 %s45, 1
          %s187 = scalar_lea.sflag [#allocation5], %s186
          %s188 = sand.u32 %s45, 1
          %s189 = smul.addr %s188, 4
          %s190 = scalar_lea.vmem [#allocation4], %s189
          %s192 = ssub.s32 64, 64
          %193 = vsyncadd %s187, %s192
          %s194 = smul.addr %s23, 64
          %s195 = scalar_lea.hbm %s0, %s194
          %s197 = sshll.u32 %s190, 4
          %s198 = int_to_ptr.vmem [resolvable:$true] %s197
          %200 = dma.hbm_to_vmem [thread:$0]  %s195, 64, %s198, %s187
        $region28: #{tpu_custom_call.1} parent=23 // pred_fallthru
          _
      $region24: #{tpu_custom_call.1} parent=5 // pred_fallthru
        _
      %p201 = scmp.le.s32.totalorder 1, %s16
      %p202 = scmp.lt.s32.totalorder %s16, 5
      %p203 = pnand %p201, %p202
      %p204 = pneg %p203
      // Predicated region
      $region29: #{tpu_custom_call.1} parent=5 // pred_check
        _
      $region30: #{tpu_custom_call.1} parent=5 // pred_check_branch
        %206 = sbr.rel (%p203) target = $region32
      $region31: #{tpu_custom_call.1} parent=5 // pred_region
        %s207 = ssub.s32 %s16, 1
        %s208 = sand.u32 %s48, 1
        %s209 = scalar_lea.sflag [#allocation5], %s208
        %s210 = sand.u32 %s48, 1
        %s211 = smul.addr %s210, 4
        %s212 = scalar_lea.vmem [#allocation4], %s211
        // Predicated region
        $region33: #{tpu_custom_call.1} parent=31 // pred_check
          %p213 = pneg %p61
        $region34: #{tpu_custom_call.1} parent=31 // pred_check_branch
          %215 = sbr.rel (%p213) target = $region36
        $region35: #{tpu_custom_call.1} parent=31 // pred_region
          %216 = dma.done %s209, 64
        $region36: #{tpu_custom_call.1} parent=31 // pred_fallthru
          _
        // Predicated region
        $region37: #{tpu_custom_call.1} parent=31 // pred_check
          %p217 = pneg %p87
        $region38: #{tpu_custom_call.1} parent=31 // pred_check_branch
          %219 = sbr.rel (%p217) target = $region40
        $region39: #{tpu_custom_call.1} parent=31 // pred_region
          %220 = dma.done [#allocation8], 256
        $region40: #{tpu_custom_call.1} parent=31 // pred_fallthru
          _
        %s221 = sand.u32 %s48, 1
        %s222 = scalar_lea.sflag [#allocation5], %s221
        %s223 = sand.u32 %s48, 1
        %s224 = smul.addr %s223, 4
        %s225 = scalar_lea.vmem [#allocation4], %s224
        %p226 = pneg %p61
        %p227 = pneg %p58
        %p228 = pneg %p87
        %p229 = pneg %p84
        %p230 = scmp.lt.s32.totalorder %s28, 0
        %s231 = scalar_select %p230, %s28, 0
        %s232 = scalar_lea.vmem %s2, %s231
        %p233 = pneg %p113
        %p234 = pneg %p110
        %p235 = pneg %p143
        %p236 = pneg %p140
        %s237 = sand.u32 %s130, 1
        %s238 = scalar_lea.sflag [#allocation6], %s237
        %s239 = sand.u32 %s130, 1
        %s240 = smul.addr %s239, 8
        %s241 = scalar_lea.vmem [#allocation9], %s240
        %p242 = scmp.lt.s32.totalorder %s28, 0
        %s243 = scalar_select %p242, %s28, 0
        %s244 = scalar_lea.vmem %s2, %s243
        %s245 = smul.u32 %s27, %s28
        %v247 = vld [vmem:[%s212] sm:$0xf]
        %v248 = vld [vmem:[#allocation7] sm:$0xf]
        %v249 = vld [vmem:[#allocation7 + $0x4] sm:$0xf]
        %v250 = vld [vmem:[#allocation7 + $0x8] sm:$0xf]
        %v251 = vld [vmem:[#allocation7 + $0xc] sm:$0xf]
        %v252 = vld [vmem:[%s244] sm:$0x1]
        %v254 = vlaneseq
        %v255 = vshrl.u32 %v254, 7
        %v256 = vsub.s32 0, %v255
        %v257 = vrot.slane %v252, %v256
        %v263 = vunpack.c.l.b16 %v248
        %v264 = vunpack.c.l.b16 %v249
        %v265 = vunpack.c.l.b16 %v250
        %v266 = vunpack.c.l.b16 %v251
        %v267 = vpack.c.b16 %v264, %v263
        %v268 = vpack.c.b16 %v266, %v265
        %vm271 = vcmask 261120
        %v273 = vsel %vm271, %v247, 0
        %275 = vmatprep.subr.bf16.mxu0 0
        %276 = vmatpush1.bf16.msra.mxu0 %v267
        %277 = vmatprep.subr.bf16.mxu0 0
        %278 = vmatpush1.bf16.msra.mxu0 %v268
        %279 = vmatprep.subr.bf16.mxu0 0
        %280 = vmatpush1.bf16.msra.mxu0 0
        %281 = vmatprep.subr.bf16.mxu0 0
        %282 = vmatpush1.bf16.msra.mxu0 0
        %283 = vmatprep.subr.bf16.mxu0 0
        %284 = vmatpush1.bf16.msra.mxu0 0
        %285 = vmatprep.subr.bf16.mxu0 0
        %286 = vmatpush1.bf16.msra.mxu0 0
        %287 = vmatprep.subr.bf16.mxu0 0
        %288 = vmatpush1.bf16.msra.mxu0 0
        %289 = vmatprep.subr.bf16.mxu0 0
        %290 = vmatpush1.bf16.msra.mxu0 0
        %291 = vmatprep.subr.bf16.mxu0 0
        %292 = vmatpush1.bf16.msra.mxu0 0
        %293 = vmatprep.subr.bf16.mxu0 0
        %294 = vmatpush1.bf16.msra.mxu0 0
        %295 = vmatprep.subr.bf16.mxu0 0
        %296 = vmatpush1.bf16.msra.mxu0 0
        %297 = vmatprep.subr.bf16.mxu0 0
        %298 = vmatpush1.bf16.msra.mxu0 0
        %299 = vmatprep.subr.bf16.mxu0 0
        %300 = vmatpush1.bf16.msra.mxu0 0
        %301 = vmatprep.subr.bf16.mxu0 0
        %302 = vmatpush1.bf16.msra.mxu0 0
        %303 = vmatprep.subr.bf16.mxu0 0
        %304 = vmatpush1.bf16.msra.mxu0 0
        %305 = vmatprep.subr.bf16.mxu0 0
        %306 = vmatpush1.bf16.msra.mxu0 0
        %307 = vmatprep.mubr.bf16.mxu0 0
        %308 = vmatmul.mubr.bf16.gmra.mrb[0].mxu0 %v273
        %v309 = vpop.f32.mrb[0].mxu0
        %v310 = vadd.f32 %v257, %v309
        %v311 = vpop.f32.mrb[0].mxu0
        %v312 = vpop.f32.mrb[0].mxu0
        %v313 = vpop.f32.mrb[0].mxu0
        %314 = vdwg.mxu0
        %p315 = scmp.eq.s32.totalorder %s27, 0
        %p316 = scmp.eq.s32.totalorder %s28, 0
        %p317 = pnand %p315, %p316
        %p318 = pneg %p317
        // Predicated region
        $region41: #{tpu_custom_call.1} parent=31 // pred_check
          _
        $region42: #{tpu_custom_call.1} parent=31 // pred_check_branch
          %320 = sbr.rel (%p317) target = $region44
        $region43: #{tpu_custom_call.1} parent=31 // pred_region
          %vm321 = vcmask 7168
          %322 = vst.msk [vmem:[#allocation2] sm:$0xff] %vm321, -inf
          %323 = vst.msk [vmem:[#allocation3] sm:$0xff] %vm321, 0.0
        $region44: #{tpu_custom_call.1} parent=31 // pred_fallthru
          _
        // Predicated region
        $region45: #{tpu_custom_call.1} parent=31 // pred_check
          %p324 = pneg %p315
        $region46: #{tpu_custom_call.1} parent=31 // pred_check_branch
          %326 = sbr.rel (%p324) target = $region48
        $region47: #{tpu_custom_call.1} parent=31 // pred_region
          %v327 = vld [vmem:[#allocation2] sm:$0xff]
          %328 = vmax.xlane.f32.xlu0 %v310
          %v329 = vpop.xlane.xlu0 %328
          %v330 = vmax.f32 %v327, %v329
          %v331 = vld [vmem:[#allocation3] sm:$0xff]
          %v332 = vsub.f32 %v327, %v330
          %v333 = vmul.f32 %v332, 1.442695
          %v334 = vpow.pop %v333
          %v335 = vmul.f32 %v331, %v334
          %337 = vset.pattern.permute.xlu0 0
          %338 = vperm.xlu0 %337, %v330
          %v339 = vpop.permute.xlu0 %338
          %v341 = vsub.f32 %v310, %v339
          %v342 = vmul.f32 %v341, 1.442695
          %v343 = vpow.pop %v342
          %344 = vadd.xlane.f32.xlu0 %v343
          %v345 = vpop.xlane.xlu0 %344
          %v346 = vadd.f32 %v335, %v345
          %vm347 = vcmask 7168
          %348 = vst.msk [vmem:[#allocation3] sm:$0xff] %vm347, %v346
          %349 = vst.msk [vmem:[#allocation2] sm:$0xff] %vm347, %v330
        $region48: #{tpu_custom_call.1} parent=31 // pred_fallthru
          _
        %p350 = scmp.eq.s32.totalorder %s27, 1
        // Predicated region
        $region49: #{tpu_custom_call.1} parent=31 // pred_check
          %p351 = pneg %p350
        $region50: #{tpu_custom_call.1} parent=31 // pred_check_branch
          %353 = sbr.rel (%p351) target = $region52
        $region51: #{tpu_custom_call.1} parent=31 // pred_region
          %v354 = vld [vmem:[#allocation2] sm:$0xff]
          %v355 = vld [vmem:[#allocation3] sm:$0xff]
          %v356 = vlog2.pop %v355
          %v357 = vmul.f32 %v356, 0.6931472
          %v358 = vadd.f32 %v354, %v357
          %360 = vset.pattern.permute.xlu0 0
          %361 = vperm.xlu0 %360, %v358
          %v362 = vpop.permute.xlu0 %361
          %v364 = vsub.f32 %v310, %v362
          %365 = vst [vmem:[%s241] sm:$0xff] %v364
        $region52: #{tpu_custom_call.1} parent=31 // pred_fallthru
          _
        %s366 = sand.u32 %s130, 1
        %s367 = scalar_lea.sflag [#allocation6], %s366
        %s368 = sand.u32 %s130, 1
        %s369 = smul.addr %s368, 8
        %s370 = scalar_lea.vmem [#allocation9], %s369
        // Predicated region
        $region53: #{tpu_custom_call.1} parent=31 // pred_check
          %p371 = pneg %p140
        $region54: #{tpu_custom_call.1} parent=31 // pred_check_branch
          %373 = sbr.rel (%p371) target = $region56
        $region55: #{tpu_custom_call.1} parent=31 // pred_region
          %s374 = smul.u32 %s27, %s28
          %s376 = ssub.s32 128, 128
          %377 = vsyncadd %s367, %s376
          %s378 = sadd.s32 %s374, %s26
          %s379 = smul.addr %s378, 128
          %s380 = scalar_lea.hbm %s3, %s379
          %s382 = sshll.u32 %s370, 4
          %s383 = int_to_ptr.vmem [resolvable:$true] %s382
          %385 = dma.vmem_to_hbm [thread:$0]  %s383, 128, %s380, %s367
        $region56: #{tpu_custom_call.1} parent=31 // pred_fallthru
          _
      $region32: #{tpu_custom_call.1} parent=5 // pred_fallthru
        _
      %p386 = scmp.le.s32.totalorder 2, %s16
      // Predicated region
      $region57: #{tpu_custom_call.1} parent=5 // pred_check
        %p387 = pneg %p386
      $region58: #{tpu_custom_call.1} parent=5 // pred_check_branch
        %389 = sbr.rel (%p387) target = $region60
      $region59: #{tpu_custom_call.1} parent=5 // pred_region
        %s390 = ssub.s32 %s16, 2
        // Predicated region
        $region61: #{tpu_custom_call.1} parent=59 // pred_check
          %p391 = pneg %p146
        $region62: #{tpu_custom_call.1} parent=59 // pred_check_branch
          %393 = sbr.rel (%p391) target = $region64
        $region63: #{tpu_custom_call.1} parent=59 // pred_region
          %s394 = sand.u32 %s131, 1
          %s395 = scalar_lea.sflag [#allocation6], %s394
          %s396 = sand.u32 %s131, 1
          %s397 = smul.addr %s396, 8
          %s398 = scalar_lea.vmem [#allocation9], %s397
          %399 = dma.done %s395, 128
        $region64: #{tpu_custom_call.1} parent=59 // pred_fallthru
          _
      $region60: #{tpu_custom_call.1} parent=5 // pred_fallthru
        _
    $region6: #{tpu_custom_call.1} parent=1 // loop_footer
      %s20 = sadd.s32 1, %s16
    $region7: #{tpu_custom_call.1} parent=1 // loop_footer_branch
      %15 = sbr.rel target = $region3
    $region8: #{tpu_custom_call.1} parent=1 // loop_exit
      _
    %400 = vsyncpa [#allocation5], 1
    %s401 = scalar_lea.sflag [#allocation5], 1
    %402 = vsyncpa %s401, 1
    %403 = vsyncpa [#allocation8], 1
    %404 = vsyncpa [#allocation6], 1
    %s405 = scalar_lea.sflag [#allocation6], 1
    %406 = vsyncpa %s405, 1

</llo_original>
